<compile_context>
chip_gen: v7x
topology: tpu7x:2x2x1
jax: 0.10.0
libtpu: 0.0.40
codegen_flags: <defaults>
</compile_context>

<pallas_src>
import jax
import jax.numpy as jnp
from jax.experimental import pallas as pl
from jax.experimental.pallas import tpu as pltpu

_MIB = 1024 * 1024


def _round_down(x: int, m: int) -> int:
    return (x // m) * m


def _round_up(x: int, m: int) -> int:
    return ((x + m - 1) // m) * m


def _vmem_capacity_bytes() -> int:
    """Best-effort query of physical VMEM; conservative (v7x) fallback."""
    try:
        info = pltpu.get_tpu_info()
        for attr in ("vmem_capacity_bytes", "vmem_size_bytes", "vmem_bytes"):
            v = getattr(info, attr, None)
            if v:
                return int(v)
    except Exception:
        pass
    return 64 * _MIB  # assume the smallest (v7x per-TC) if the query fails


def _sublane_multiple(itemsize: int) -> int:
    # f32 -> 8, bf16/fp16 -> 16, int8/fp8 -> 32 (sub-32-bit dtypes pack along sublanes)
    return max(8, 32 // max(1, itemsize))


def _make_concat_kernel(num_concat: int, hidden: int):
    """Kernel copying `num_concat` (ts, H) tiles into one (ts, C*H) tile."""

    def kernel(*refs):
        out_ref = refs[num_concat]
        # Static unrolled loop; each store is a contiguous lane slab of width H
        # inside the (C*H)-wide output tile (unmasked vst when H % 128 == 0).
        for k in range(num_concat):
            out_ref[:, k * hidden:(k + 1) * hidden] = refs[k][...]

    return kernel


def concat_hidden_states(all_hidden_states, num_concat: int, *, seq_tile=None):
    """JAX/Pallas equivalent of ConcatHiddenStates.forward.

    all_hidden_states: sequence of arrays, each (B, S, H), same shape/dtype.
    Returns (B, S, C * H) with C = len(all_hidden_states[-num_concat:]).
    """
    hs = list(all_hidden_states[-num_concat:])
    C = len(hs)
    B, S, H = hs[0].shape
    dtype = hs[0].dtype
    for x in hs:
        assert x.shape == (B, S, H), "all concatenated hidden states must share a shape"
        assert x.dtype == dtype, "all concatenated hidden states must share a dtype"

    itemsize = jnp.dtype(dtype).itemsize
    rows = B * S
    mult = _sublane_multiple(itemsize)

    # ---- generation-aware VMEM budgets ----------------------------------------
    vmem_cap = _vmem_capacity_bytes()
    if vmem_cap >= 96 * _MIB:           # v5e / v6e: 128 MiB physical
        double_buf_budget = 56 * _MIB
        vmem_limit_cap = 100 * _MIB
    else:                               # v7x: 64 MiB physical per TensorCore
        double_buf_budget = 28 * _MIB
        vmem_limit_cap = 48 * _MIB

    # Per grid step: C input blocks of (ts, H) + 1 output block of (ts, C*H)
    #   -> 2*C*ts*H*itemsize bytes, double-buffered -> 4*C*ts*H*itemsize.
    bytes_per_row_db = 4 * C * H * itemsize

    if seq_tile is None:
        ts = max(mult, _round_down(double_buf_budget // bytes_per_row_db, mult))
        ts = min(ts, _round_up(rows, mult))
        # Prefer >= 2 (and even) grid steps so a v7x megacore split has work on
        # both TensorCores.
        steps = pl.cdiv(rows, ts)
        if steps == 1 and rows > mult:
            ts = max(mult, _round_up(pl.cdiv(rows, 2), mult))
        elif steps > 1 and steps % 2 == 1:
            ts2 = max(mult, _round_up(pl.cdiv(rows, steps + 1), mult))
            if pl.cdiv(rows, ts2) % 2 == 0:
                ts = ts2
        ts = min(ts, rows) if rows >= mult else rows
    else:
        ts = int(seq_tile)

    grid = (pl.cdiv(rows, ts),)

    step_bytes = 2 * C * ts * H * itemsize
    vmem_limit = int(min(vmem_limit_cap, max(16 * _MIB, 2 * step_bytes + 4 * _MIB)))

    total_bytes = 2 * C * rows * H * itemsize  # read everything once, write it once

    # Flatten leading dims: free metadata reshape on contiguous (B, S) prefix.
    hs_flat = [x.reshape(rows, H) for x in hs]

    kernel = _make_concat_kernel(C, H)

    in_specs = [pl.BlockSpec((ts, H), lambda i: (i, 0)) for _ in range(C)]
    out_spec = pl.BlockSpec((ts, C * H), lambda i: (i, 0))

    out_flat = pl.pallas_call(
        kernel,
        out_shape=jax.ShapeDtypeStruct((rows, C * H), dtype),
        grid=grid,
        in_specs=in_specs,
        out_specs=out_spec,
        compiler_params=pltpu.CompilerParams(
            dimension_semantics=("parallel",),
            vmem_limit_bytes=vmem_limit,
        ),
        cost_estimate=pl.CostEstimate(
            flops=0, transcendentals=0, bytes_accessed=total_bytes
        ),
    )(*hs_flat)

    return out_flat.reshape(B, S, C * H)


def _reference(all_hidden_states, num_concat):
    return jnp.concatenate(list(all_hidden_states[-num_concat:]), axis=-1)


if __name__ == "__main__":
    # Small shapes consistent with the module: a stack of transformer hidden states.
    B, S, H = 2, 16, 128
    num_layers, num_concat = 5, 3

    key = jax.random.PRNGKey(0)
    keys = jax.random.split(key, num_layers)
    all_hidden_states = tuple(
        jax.random.normal(k, (B, S, H), dtype=jnp.float32) for k in keys
    )

    out = concat_hidden_states(all_hidden_states, num_concat)
    out = jax.block_until_ready(out)

    ref = _reference(all_hidden_states, num_concat)
    assert out.shape == (B, S, num_concat * H), out.shape
    assert jnp.array_equal(out, ref), "mismatch vs reference"

    print("KERNEL_OK")
</pallas_src>

<mosaic_0001>
module attributes {stable_mosaic.version = 11 : i64} {
  func.func @kernel(%arg0: i32, %arg1: memref<16x128xf32, #tpu.memory_space<vmem>>, %arg2: memref<16x128xf32, #tpu.memory_space<vmem>>, %arg3: memref<16x128xf32, #tpu.memory_space<vmem>>, %arg4: memref<16x384xf32, #tpu.memory_space<vmem>>) attributes {dimension_semantics = [#tpu.dimension_semantics<parallel>], iteration_bounds = array<i64: 2>, scalar_prefetch = 0 : i64, scratch_operands = 0 : i64, tpu.core_type = #tpu.core_type<tc>, window_params = [{transform_indices = @transform_0, window_bounds = array<i64: 16, 128>}, {transform_indices = @transform_1, window_bounds = array<i64: 16, 128>}, {transform_indices = @transform_2, window_bounds = array<i64: 16, 128>}, {transform_indices = @transform_3, window_bounds = array<i64: 16, 384>}]} {
    %c0 = arith.constant 0 : index
    %c0_0 = arith.constant 0 : index
    %0 = vector.load %arg1[%c0, %c0_0] : memref<16x128xf32, #tpu.memory_space<vmem>>, vector<16x128xf32>
    %c0_1 = arith.constant 0 : index
    %c0_2 = arith.constant 0 : index
    %1 = vector.load %arg4[%c0_1, %c0_2] : memref<16x384xf32, #tpu.memory_space<vmem>>, vector<16x128xf32>
    tpu.vector_store %arg4[%c0_1, %c0_2], %0 {strides = array<i32>} : memref<16x384xf32, #tpu.memory_space<vmem>>, vector<16x128xf32>,
    %c0_3 = arith.constant 0 : index
    %c0_4 = arith.constant 0 : index
    %2 = vector.load %arg2[%c0_3, %c0_4] : memref<16x128xf32, #tpu.memory_space<vmem>>, vector<16x128xf32>
    %c0_5 = arith.constant 0 : index
    %c128 = arith.constant 128 : index
    %3 = vector.load %arg4[%c0_5, %c128] : memref<16x384xf32, #tpu.memory_space<vmem>>, vector<16x128xf32>
    tpu.vector_store %arg4[%c0_5, %c128], %2 {strides = array<i32>} : memref<16x384xf32, #tpu.memory_space<vmem>>, vector<16x128xf32>,
    %c0_6 = arith.constant 0 : index
    %c0_7 = arith.constant 0 : index
    %4 = vector.load %arg3[%c0_6, %c0_7] : memref<16x128xf32, #tpu.memory_space<vmem>>, vector<16x128xf32>
    %c0_8 = arith.constant 0 : index
    %c256 = arith.constant 256 : index
    %5 = vector.load %arg4[%c0_8, %c256] : memref<16x384xf32, #tpu.memory_space<vmem>>, vector<16x128xf32>
    tpu.vector_store %arg4[%c0_8, %c256], %4 {strides = array<i32>} : memref<16x384xf32, #tpu.memory_space<vmem>>, vector<16x128xf32>,
    return
  }
  func.func @transform_0(%arg0: i32) -> (i32, i32) {
    %c0_i32 = arith.constant 0 : i32
    %c0_i32_0 = arith.constant 0 : i32
    return %arg0, %c0_i32 : i32, i32
  }
  func.func @transform_1(%arg0: i32) -> (i32, i32) {
    %c0_i32 = arith.constant 0 : i32
    %c0_i32_0 = arith.constant 0 : i32
    return %arg0, %c0_i32 : i32, i32
  }
  func.func @transform_2(%arg0: i32) -> (i32, i32) {
    %c0_i32 = arith.constant 0 : i32
    %c0_i32_0 = arith.constant 0 : i32
    return %arg0, %c0_i32 : i32, i32
  }
  func.func @transform_3(%arg0: i32) -> (i32, i32) {
    %c0_i32 = arith.constant 0 : i32
    %c0_i32_0 = arith.constant 0 : i32
    return %arg0, %c0_i32 : i32, i32
  }
}

</mosaic_0001>

<llo_original>
// kernel: tpu_custom_call.1
$region0: #{tpu_custom_call.1}
  #allocation0 [shape = 'u32[]', space=smem, size = 0x4, offset = 0x4, fixed_abs, tag = 'smem constant byte address 0x4 - core index']
  #allocation1 [shape = 'u32[144,128]{1,0:T(1,128)}', space=vmem, size = 0x12000, scoped, tag = 'internal scratch']
  %s0 = inlined_call_operand.hbm [shape: f32[32,128], index: 0, kind: input, shape index: {}]
  %s1 = inlined_call_operand.hbm [shape: f32[32,128], index: 1, kind: input, shape index: {}]
  %s2 = inlined_call_operand.hbm [shape: f32[32,128], index: 2, kind: input, shape index: {}]
  %s3 = inlined_call_operand.hbm [shape: f32[32,384], index: 3, kind: output, shape index: {}]
  %s4 = sld [smem:[#allocation0]]
  $region57: #{tpu_custom_call.1} parent=0
    _
  %s6 = ssub.s32 1, %s4
  %s7 = scalar_select 0, %s6, %s4
  $region1: #{tpu_custom_call.1} parent=0
    #allocation2 [shape = 'u8[16384]{0}', space=vmem, size = 0x4000, scoped, tag = 'input window, operand 0']
    #allocation3 [shape = 's32[2]{0}', space=sflag, size = 0x8, scoped, tag = 'scoped memory for tpu_custom_call.1']
    #allocation4 [shape = 's32[2]{0}', space=sflag, size = 0x8, scoped, tag = 'scoped memory for tpu_custom_call.1']
    #allocation5 [shape = 'u8[16384]{0}', space=vmem, size = 0x4000, scoped, tag = 'input window, operand 1']
    #allocation6 [shape = 's32[2]{0}', space=sflag, size = 0x8, scoped, tag = 'scoped memory for tpu_custom_call.1']
    #allocation7 [shape = 'u8[16384]{0}', space=vmem, size = 0x4000, scoped, tag = 'input window, operand 2']
    #allocation8 [shape = 'u8[49152]{0}', space=vmem, size = 0xc000, scoped, tag = 'output window, operand 0']
    %8 = vsyncpa [#allocation3], 0
    %s9 = scalar_lea.sflag [#allocation3], 1
    %10 = vsyncpa %s9, 0
    %11 = vsyncpa [#allocation6], 0
    %s12 = scalar_lea.sflag [#allocation6], 1
    %13 = vsyncpa %s12, 0
    %14 = vsyncpa [#allocation4], 0
    %s15 = scalar_lea.sflag [#allocation4], 1
    %16 = vsyncpa %s15, 0
    loop: start=0, step=1, limit=4
    $region2: #{tpu_custom_call.1} parent=1 // loop_pre_header
      _
    $region3: #{tpu_custom_call.1} parent=1 // loop_header
      %s18 = sphi 0, %s22
      %p19 = scmp.ge.s32.totalorder %s18, 4
      %s28 = sphi 0, %s30
      %s31 = sphi 0, %s28
      %s32 = sphi 0, %s31
      %s48 = sphi 0, %s32
      %s54 = sphi 0, %s56
      %s57 = sphi 0, %s54
      %s58 = sphi 0, %s57
      %s74 = sphi 0, %s58
      %s80 = sphi 0, %s82
      %s83 = sphi 0, %s80
      %s84 = sphi 0, %s83
      %s100 = sphi 0, %s84
      %s106 = sphi 0, %s108
      %s109 = sphi 0, %s106
      %s110 = sphi 0, %s109
      %s126 = sphi 0, %s110
    $region4: #{tpu_custom_call.1} parent=1 // loop_header_branch
      %21 = sbr.rel (%p19) target = $region8
    $region5: #{tpu_custom_call.1} parent=1 // loop_body
      %s23 = ssub.s32 %s18, 1
      %s24 = ssub.s32 %s18, 2
      %s25 = sadd.s32 %s18, 1
      %s26 = ssub.s32 %s18, %s25
      %p27 = scmp.eq.s32.totalorder %s26, 0
      %s29 = sadd.s32 %s28, 1
      %s30 = scalar_select %p27, %s28, %s29
      %p33 = pneg %p27
      %p34 = scmp.eq.s32.totalorder %s18, 1
      %p35 = por %p33, %p34
      %p36 = scmp.ne.s32.totalorder %s28, %s31
      %p37 = scmp.eq.s32.totalorder %s18, 0
      %p38 = por %p36, %p37
      %p39 = scmp.ne.s32.totalorder %s28, %s31
      %p40 = scmp.eq.s32.totalorder %s23, 1
      %p41 = por %p39, %p40
      %p42 = scmp.ne.s32.totalorder %s31, %s32
      %p43 = scmp.eq.s32.totalorder %s23, 0
      %p44 = por %p42, %p43
      %p45 = scmp.ne.s32.totalorder %s31, %s32
      %p46 = scmp.eq.s32.totalorder %s24, 1
      %p47 = por %p45, %p46
      %p49 = scmp.ne.s32.totalorder %s32, %s48
      %p50 = scmp.eq.s32.totalorder %s24, 0
      %p51 = por %p49, %p50
      %s52 = ssub.s32 %s18, %s25
      %p53 = scmp.eq.s32.totalorder %s52, 0
      %s55 = sadd.s32 %s54, 1
      %s56 = scalar_select %p53, %s54, %s55
      %p59 = pneg %p53
      %p60 = scmp.eq.s32.totalorder %s18, 1
      %p61 = por %p59, %p60
      %p62 = scmp.ne.s32.totalorder %s54, %s57
      %p63 = scmp.eq.s32.totalorder %s18, 0
      %p64 = por %p62, %p63
      %p65 = scmp.ne.s32.totalorder %s54, %s57
      %p66 = scmp.eq.s32.totalorder %s23, 1
      %p67 = por %p65, %p66
      %p68 = scmp.ne.s32.totalorder %s57, %s58
      %p69 = scmp.eq.s32.totalorder %s23, 0
      %p70 = por %p68, %p69
      %p71 = scmp.ne.s32.totalorder %s57, %s58
      %p72 = scmp.eq.s32.totalorder %s24, 1
      %p73 = por %p71, %p72
      %p75 = scmp.ne.s32.totalorder %s58, %s74
      %p76 = scmp.eq.s32.totalorder %s24, 0
      %p77 = por %p75, %p76
      %s78 = ssub.s32 %s18, %s25
      %p79 = scmp.eq.s32.totalorder %s78, 0
      %s81 = sadd.s32 %s80, 1
      %s82 = scalar_select %p79, %s80, %s81
      %p85 = pneg %p79
      %p86 = scmp.eq.s32.totalorder %s18, 1
      %p87 = por %p85, %p86
      %p88 = scmp.ne.s32.totalorder %s80, %s83
      %p89 = scmp.eq.s32.totalorder %s18, 0
      %p90 = por %p88, %p89
      %p91 = scmp.ne.s32.totalorder %s80, %s83
      %p92 = scmp.eq.s32.totalorder %s23, 1
      %p93 = por %p91, %p92
      %p94 = scmp.ne.s32.totalorder %s83, %s84
      %p95 = scmp.eq.s32.totalorder %s23, 0
      %p96 = por %p94, %p95
      %p97 = scmp.ne.s32.totalorder %s83, %s84
      %p98 = scmp.eq.s32.totalorder %s24, 1
      %p99 = por %p97, %p98
      %p101 = scmp.ne.s32.totalorder %s84, %s100
      %p102 = scmp.eq.s32.totalorder %s24, 0
      %p103 = por %p101, %p102
      %s104 = ssub.s32 %s18, %s25
      %p105 = scmp.eq.s32.totalorder %s104, 0
      %s107 = sadd.s32 %s106, 1
      %s108 = scalar_select %p105, %s106, %s107
      %p111 = pneg %p105
      %p112 = scmp.eq.s32.totalorder %s18, 1
      %p113 = por %p111, %p112
      %p114 = scmp.ne.s32.totalorder %s106, %s109
      %p115 = scmp.eq.s32.totalorder %s18, 0
      %p116 = por %p114, %p115
      %p117 = scmp.ne.s32.totalorder %s106, %s109
      %p118 = scmp.eq.s32.totalorder %s23, 1
      %p119 = por %p117, %p118
      %p120 = scmp.ne.s32.totalorder %s109, %s110
      %p121 = scmp.eq.s32.totalorder %s23, 0
      %p122 = por %p120, %p121
      %p123 = scmp.ne.s32.totalorder %s109, %s110
      %p124 = scmp.eq.s32.totalorder %s24, 1
      %p125 = por %p123, %p124
      %p127 = scmp.ne.s32.totalorder %s110, %s126
      %p128 = scmp.eq.s32.totalorder %s24, 0
      %p129 = por %p127, %p128
      %p130 = scmp.le.s32.totalorder 1, %s18
      %p131 = scmp.lt.s32.totalorder %s18, 3
      %p132 = pnand %p130, %p131
      %p133 = pneg %p132
      // Predicated region
      $region9: #{tpu_custom_call.1} parent=5 // pred_check
        _
      $region10: #{tpu_custom_call.1} parent=5 // pred_check_branch
        %135 = sbr.rel (%p132) target = $region12
      $region11: #{tpu_custom_call.1} parent=5 // pred_region
        %s136 = ssub.s32 %s18, 1
      $region12: #{tpu_custom_call.1} parent=5 // pred_fallthru
        _
      %p137 = scmp.lt.s32.totalorder %s18, 2
      // Predicated region
      $region13: #{tpu_custom_call.1} parent=5 // pred_check
        %p138 = pneg %p137
      $region14: #{tpu_custom_call.1} parent=5 // pred_check_branch
        %140 = sbr.rel (%p138) target = $region16
      $region15: #{tpu_custom_call.1} parent=5 // pred_region
        // Predicated region
        $region17: #{tpu_custom_call.1} parent=15 // pred_check
          %p141 = pneg %p38
        $region18: #{tpu_custom_call.1} parent=15 // pred_check_branch
          %143 = sbr.rel (%p141) target = $region20
        $region19: #{tpu_custom_call.1} parent=15 // pred_region
          %s144 = sand.u32 %s28, 1
          %s145 = scalar_lea.sflag [#allocation3], %s144
          %s146 = sand.u32 %s28, 1
          %s147 = smul.addr %s146, 16
          %s148 = scalar_lea.vmem [#allocation2], %s147
          %s149 = smul.u32 2, %s18
          %s151 = ssub.s32 256, 256
          %152 = vsyncadd %s145, %s151
          %s153 = smul.addr %s149, 128
          %s154 = scalar_lea.hbm %s0, %s153
          %s155 = sshll.u32 %s148, 4
          %s156 = int_to_ptr.vmem [resolvable:$true] %s155
          %161 = dma.hbm_to_vmem [thread:$0]  %s154, 256, %s156, %s145, 128, 128, 8
        $region20: #{tpu_custom_call.1} parent=15 // pred_fallthru
          _
        // Predicated region
        $region21: #{tpu_custom_call.1} parent=15 // pred_check
          %p162 = pneg %p64
        $region22: #{tpu_custom_call.1} parent=15 // pred_check_branch
          %164 = sbr.rel (%p162) target = $region24
        $region23: #{tpu_custom_call.1} parent=15 // pred_region
          %s165 = sand.u32 %s18, 1
          %s166 = scalar_lea.sflag [#allocation6], %s165
          %s167 = sand.u32 %s54, 1
          %s168 = smul.addr %s167, 16
          %s169 = scalar_lea.vmem [#allocation5], %s168
          %s170 = smul.u32 2, %s18
          %s172 = ssub.s32 256, 256
          %173 = vsyncadd %s166, %s172
          %s174 = smul.addr %s170, 128
          %s175 = scalar_lea.hbm %s1, %s174
          %s176 = sshll.u32 %s169, 4
          %s177 = int_to_ptr.vmem [resolvable:$true] %s176
          %182 = dma.hbm_to_vmem [thread:$0]  %s175, 256, %s177, %s166, 128, 128, 8
        $region24: #{tpu_custom_call.1} parent=15 // pred_fallthru
          _
        // Predicated region
        $region25: #{tpu_custom_call.1} parent=15 // pred_check
          %p183 = pneg %p90
        $region26: #{tpu_custom_call.1} parent=15 // pred_check_branch
          %185 = sbr.rel (%p183) target = $region28
        $region27: #{tpu_custom_call.1} parent=15 // pred_region
          %s186 = sand.u32 %s18, 1
          %s187 = scalar_lea.sflag [#allocation6], %s186
          %s188 = sand.u32 %s80, 1
          %s189 = smul.addr %s188, 16
          %s190 = scalar_lea.vmem [#allocation7], %s189
          %s191 = smul.u32 2, %s18
          %s193 = ssub.s32 256, 256
          %194 = vsyncadd %s187, %s193
          %s195 = smul.addr %s191, 128
          %s196 = scalar_lea.hbm %s2, %s195
          %s197 = sshll.u32 %s190, 4
          %s198 = int_to_ptr.vmem [resolvable:$true] %s197
          %203 = dma.hbm_to_vmem [thread:$0]  %s196, 256, %s198, %s187, 128, 128, 8
        $region28: #{tpu_custom_call.1} parent=15 // pred_fallthru
          _
      $region16: #{tpu_custom_call.1} parent=5 // pred_fallthru
        _
      %p204 = scmp.le.s32.totalorder 1, %s18
      %p205 = scmp.lt.s32.totalorder %s18, 3
      %p206 = pnand %p204, %p205
      %p207 = pneg %p206
      // Predicated region
      $region29: #{tpu_custom_call.1} parent=5 // pred_check
        _
      $region30: #{tpu_custom_call.1} parent=5 // pred_check_branch
        %209 = sbr.rel (%p206) target = $region32
      $region31: #{tpu_custom_call.1} parent=5 // pred_region
        %s210 = ssub.s32 %s18, 1
        %s211 = sand.u32 %s31, 1
        %s212 = scalar_lea.sflag [#allocation3], %s211
        %s213 = sand.u32 %s31, 1
        %s214 = smul.addr %s213, 16
        %s215 = scalar_lea.vmem [#allocation2], %s214
        // Predicated region
        $region33: #{tpu_custom_call.1} parent=31 // pred_check
          %p216 = pneg %p44
        $region34: #{tpu_custom_call.1} parent=31 // pred_check_branch
          %218 = sbr.rel (%p216) target = $region36
        $region35: #{tpu_custom_call.1} parent=31 // pred_region
          %219 = dma.done %s212, 256
        $region36: #{tpu_custom_call.1} parent=31 // pred_fallthru
          _
        %s220 = sand.u32 %s23, 1
        %s221 = scalar_lea.sflag [#allocation6], %s220
        %s222 = sand.u32 %s57, 1
        %s223 = smul.addr %s222, 16
        %s224 = scalar_lea.vmem [#allocation5], %s223
        // Predicated region
        $region37: #{tpu_custom_call.1} parent=31 // pred_check
          %p225 = pneg %p70
        $region38: #{tpu_custom_call.1} parent=31 // pred_check_branch
          %227 = sbr.rel (%p225) target = $region40
        $region39: #{tpu_custom_call.1} parent=31 // pred_region
          %228 = dma.done %s221, 256
        $region40: #{tpu_custom_call.1} parent=31 // pred_fallthru
          _
        %s229 = sand.u32 %s23, 1
        %s230 = scalar_lea.sflag [#allocation6], %s229
        %s231 = sand.u32 %s83, 1
        %s232 = smul.addr %s231, 16
        %s233 = scalar_lea.vmem [#allocation7], %s232
        // Predicated region
        $region41: #{tpu_custom_call.1} parent=31 // pred_check
          %p234 = pneg %p96
        $region42: #{tpu_custom_call.1} parent=31 // pred_check_branch
          %236 = sbr.rel (%p234) target = $region44
        $region43: #{tpu_custom_call.1} parent=31 // pred_region
          %237 = dma.done %s230, 256
        $region44: #{tpu_custom_call.1} parent=31 // pred_fallthru
          _
        %s238 = sand.u32 %s31, 1
        %s239 = scalar_lea.sflag [#allocation3], %s238
        %s240 = sand.u32 %s31, 1
        %s241 = smul.addr %s240, 16
        %s242 = scalar_lea.vmem [#allocation2], %s241
        %p243 = pneg %p44
        %p244 = pneg %p41
        %s245 = sand.u32 %s23, 1
        %s246 = scalar_lea.sflag [#allocation6], %s245
        %s247 = sand.u32 %s57, 1
        %s248 = smul.addr %s247, 16
        %s249 = scalar_lea.vmem [#allocation5], %s248
        %p250 = pneg %p70
        %p251 = pneg %p67
        %s252 = sand.u32 %s23, 1
        %s253 = scalar_lea.sflag [#allocation6], %s252
        %s254 = sand.u32 %s83, 1
        %s255 = smul.addr %s254, 16
        %s256 = scalar_lea.vmem [#allocation7], %s255
        %p257 = pneg %p96
        %p258 = pneg %p93
        %p259 = pneg %p122
        %p260 = pneg %p119
        %s261 = sand.u32 %s109, 1
        %s262 = scalar_lea.sflag [#allocation4], %s261
        %s263 = sand.u32 %s109, 1
        %s264 = smul.addr %s263, 48
        %s265 = scalar_lea.vmem [#allocation8], %s264
        %s266 = smul.u32 2, %s23
        %s267 = smul.u32 2, %s23
        %s268 = smul.u32 2, %s23
        %s269 = smul.u32 2, %s23
        %v270 = vld [vmem:[%s215] sm:$0xff]
        %v271 = vld [vmem:[%s215 + $0x8] sm:$0xff]
        %272 = vst [vmem:[%s265] sm:$0xff] %v270
        %273 = vst [vmem:[%s265 + $0x18] sm:$0xff] %v271
        %v274 = vld [vmem:[%s224] sm:$0xff]
        %v275 = vld [vmem:[%s224 + $0x8] sm:$0xff]
        %276 = vst [vmem:[%s265 + $0x8] sm:$0xff] %v274
        %277 = vst [vmem:[%s265 + $0x20] sm:$0xff] %v275
        %v278 = vld [vmem:[%s233] sm:$0xff]
        %v279 = vld [vmem:[%s233 + $0x8] sm:$0xff]
        %280 = vst [vmem:[%s265 + $0x10] sm:$0xff] %v278
        %281 = vst [vmem:[%s265 + $0x28] sm:$0xff] %v279
        %s282 = sand.u32 %s109, 1
        %s283 = scalar_lea.sflag [#allocation4], %s282
        %s284 = sand.u32 %s109, 1
        %s285 = smul.addr %s284, 48
        %s286 = scalar_lea.vmem [#allocation8], %s285
        // Predicated region
        $region45: #{tpu_custom_call.1} parent=31 // pred_check
          %p287 = pneg %p119
        $region46: #{tpu_custom_call.1} parent=31 // pred_check_branch
          %289 = sbr.rel (%p287) target = $region48
        $region47: #{tpu_custom_call.1} parent=31 // pred_region
          %s290 = smul.u32 2, %s23
          %s292 = ssub.s32 768, 768
          %293 = vsyncadd %s283, %s292
          %s294 = smul.addr %s290, 3
          %s295 = smul.addr %s294, 128
          %s296 = scalar_lea.hbm %s3, %s295
          %s297 = sshll.u32 %s286, 4
          %s298 = int_to_ptr.vmem [resolvable:$true] %s297
          %303 = dma.vmem_to_hbm [thread:$0]  %s298, 768, %s296, %s283, 384, 384, 24
        $region48: #{tpu_custom_call.1} parent=31 // pred_fallthru
          _
      $region32: #{tpu_custom_call.1} parent=5 // pred_fallthru
        _
      %p304 = scmp.le.s32.totalorder 2, %s18
      // Predicated region
      $region49: #{tpu_custom_call.1} parent=5 // pred_check
        %p305 = pneg %p304
      $region50: #{tpu_custom_call.1} parent=5 // pred_check_branch
        %307 = sbr.rel (%p305) target = $region52
      $region51: #{tpu_custom_call.1} parent=5 // pred_region
        %s308 = ssub.s32 %s18, 2
        // Predicated region
        $region53: #{tpu_custom_call.1} parent=51 // pred_check
          %p309 = pneg %p125
        $region54: #{tpu_custom_call.1} parent=51 // pred_check_branch
          %311 = sbr.rel (%p309) target = $region56
        $region55: #{tpu_custom_call.1} parent=51 // pred_region
          %s312 = sand.u32 %s110, 1
          %s313 = scalar_lea.sflag [#allocation4], %s312
          %s314 = sand.u32 %s110, 1
          %s315 = smul.addr %s314, 48
          %s316 = scalar_lea.vmem [#allocation8], %s315
          %317 = dma.done %s313, 768
        $region56: #{tpu_custom_call.1} parent=51 // pred_fallthru
          _
      $region52: #{tpu_custom_call.1} parent=5 // pred_fallthru
        _
    $region6: #{tpu_custom_call.1} parent=1 // loop_footer
      %s22 = sadd.s32 1, %s18
    $region7: #{tpu_custom_call.1} parent=1 // loop_footer_branch
      %17 = sbr.rel target = $region3
    $region8: #{tpu_custom_call.1} parent=1 // loop_exit
      _
    %318 = vsyncpa [#allocation3], 1
    %s319 = scalar_lea.sflag [#allocation3], 1
    %320 = vsyncpa %s319, 1
    %321 = vsyncpa [#allocation6], 1
    %s322 = scalar_lea.sflag [#allocation6], 1
    %323 = vsyncpa %s322, 1
    %324 = vsyncpa [#allocation4], 1
    %s325 = scalar_lea.sflag [#allocation4], 1
    %326 = vsyncpa %s325, 1

</llo_original>
